<compile_context>
chip_gen: v6e
topology: v6e:2x2x1
jax: 0.10.0
libtpu: 0.0.40
codegen_flags: <defaults>
</compile_context>

<pallas_src>
import functools

import jax
import jax.numpy as jnp
from jax.experimental import pallas as pl
from jax.experimental.pallas import tpu as pltpu


_TARGET_STEP_DMA_BYTES = 4 << 20   # ~2-4 MiB of fresh input DMA per grid step
_MIN_GRID_STEPS = 2                # keep both v7x TensorCores busy


def _round_up(v, m):
    return ((v + m - 1) // m) * m


def _vmem_budget_bytes():
    """Per-generation VMEM budget for the double-buffered working set."""
    cap = 64 << 20                 # conservative default (v7x per-TC VMEM)
    try:
        cap = int(getattr(pltpu.get_tpu_info(), "vmem_capacity_bytes", cap))
    except Exception:
        pass
    # ~32 MiB on v7x (64 MiB/TC), ~64 MiB on v5e/v6e (128 MiB/TC).
    return max(16 << 20, min(cap // 2, 64 << 20))


def _auto_tile_rows(batch, dma_row_bytes, vmem_row_bytes, resident_bytes, budget):
    # (a) blocks big enough (in bytes) to amortize ~0.35us per-grid-step cost
    rows_by_size = _TARGET_STEP_DMA_BYTES // max(dma_row_bytes, 1)
    # (b) double-buffered working set (+ resident table + headroom) fits VMEM
    avail = budget - resident_bytes - (4 << 20)
    rows_by_budget = max(avail, 8 * vmem_row_bytes) // max(vmem_row_bytes, 1)
    # (c) at least _MIN_GRID_STEPS grid steps so both v7x TensorCores get work
    rows_by_cores = pl.cdiv(batch, _MIN_GRID_STEPS)
    rows = min(rows_by_size, rows_by_budget, rows_by_cores, batch)
    return max(8, (int(rows) // 8) * 8)


# --------------------------------------------------------------------------
# Kernels
# --------------------------------------------------------------------------
def _stream_loss_kernel(x_ref, w_ref, loss_ref, *, weights_sum_to_one):
    """Streaming kernel: weights already materialized as a (B, C) array."""
    x = x_ref[...].astype(jnp.float32)            # (tile_rows, C)
    c = w_ref[...].astype(jnp.float32)            # (tile_rows, C)

    # loss = sum(c) * (m + log(sum(exp(x - m)))) - sum(c * x)
    #      == -(sum(c * log_softmax(x)))   (log-softmax tile never materialized)
    m = jnp.max(x, axis=1, keepdims=True)
    lse = jnp.log(jnp.sum(jnp.exp(x - m), axis=1, keepdims=True))
    cx = jnp.sum(c * x, axis=1, keepdims=True)
    if weights_sum_to_one:
        c_sum = jnp.float32(1.0)                  # rows of `confidence` sum to 1
    else:
        c_sum = jnp.sum(c, axis=1, keepdims=True)
    loss_ref[...] = c_sum * (m + lse) - cx


def _fused_gather_loss_kernel(x_ref, idx_ref, conf_ref, loss_ref, *,
                              gather_chunk, weights_sum_to_one):
    """Fused kernel: gathers confidence[index] rows in-kernel.

    conf_ref holds the whole (padded) confidence table; its block index is
    constant so the pipeline fetches it once and keeps it VMEM-resident.
    The row gather is a chunked one-hot matmul on the otherwise-idle MXU.
    """
    x = x_ref[...].astype(jnp.float32)            # (tile_rows, C)
    idx = idx_ref[...]                            # (tile_rows, 1) int32
    tb = x.shape[0]
    n_pad = conf_ref.shape[0]

    # TODO(synk): replace with a vectorized sublane dynamic_gather (small C) or
    # a scalar-prefetched DMA row gather (large C / table > VMEM) when needed.
    w = jnp.zeros_like(x)
    for off in range(0, n_pad, gather_chunk):
        lanes = jax.lax.broadcasted_iota(jnp.int32, (tb, gather_chunk), 1) + off
        onehot = (idx == lanes).astype(jnp.float32)          # (tb, gather_chunk)
        conf_chunk = conf_ref[off:off + gather_chunk, :].astype(jnp.float32)
        w = w + jnp.dot(onehot, conf_chunk,
                        preferred_element_type=jnp.float32,
                        precision=jax.lax.Precision.HIGHEST)

    m = jnp.max(x, axis=1, keepdims=True)
    lse = jnp.log(jnp.sum(jnp.exp(x - m), axis=1, keepdims=True))
    cx = jnp.sum(w * x, axis=1, keepdims=True)
    if weights_sum_to_one:
        c_sum = jnp.float32(1.0)
    else:
        c_sum = jnp.sum(w, axis=1, keepdims=True)
    loss_ref[...] = c_sum * (m + lse) - cx


# --------------------------------------------------------------------------
# Wrapper
# --------------------------------------------------------------------------
def partial_loss_forward(outputs, confidence, index, targets=None, *,
                         tile_rows=None, fuse_gather=None,
                         weights_sum_to_one=False):
    """Pallas port of partial_loss.forward -> (average_loss, loss_vec)."""
    B, C = outputs.shape
    x_esize = jnp.dtype(outputs.dtype).itemsize      # bf16 stays bf16 in HBM
    budget = _vmem_budget_bytes()

    # ---------------- choose gather strategy ----------------
    use_fused = False
    if targets is None:
        N = confidence.shape[0]
        conf_esize = jnp.dtype(confidence.dtype).itemsize
        table_bytes = _round_up(N, 8) * C * conf_esize
        if fuse_gather is None:
            # Fuse while the one-hot MXU cost stays under the ~2 extra HBM
            # passes it removes (N = O(1k)) and the (double-buffered) table
            # fits comfortably inside the VMEM budget.
            use_fused = (N <= 1024) and (2 * table_bytes <= budget // 4)
        else:
            use_fused = bool(fuse_gather)

    if use_fused:
        # -------- fused-gather path: confidence table resident in VMEM --------
        N = confidence.shape[0]
        conf_esize = jnp.dtype(confidence.dtype).itemsize
        gather_chunk = 512 if N > 512 else _round_up(N, 8)
        n_pad = _round_up(N, gather_chunk)
        conf = confidence
        if n_pad != N:                              # zero rows contribute nothing
            conf = jnp.pad(conf, ((0, n_pad - N), (0, 0)))
        idx2 = index.astype(jnp.int32).reshape(B, 1)

        resident = 2 * n_pad * C * conf_esize       # pipeline allocs 2 buffers
        dma_row = C * x_esize + 4
        vmem_row = 2 * (C * x_esize + 4 + 4) + 2 * C * 4 + gather_chunk * 4
        tr = tile_rows or _auto_tile_rows(B, dma_row, vmem_row, resident, budget)
        tr = max(8, _round_up(int(tr), 8))
        grid = (pl.cdiv(B, tr),)

        working = resident + vmem_row * tr
        vmem_limit = int(max(min(working + (8 << 20), budget), 16 << 20))
        cost = pl.CostEstimate(
            flops=int(2 * B * n_pad * C + 6 * B * C),
            transcendentals=int(B * C),
            bytes_accessed=int(B * C * x_esize + n_pad * C * conf_esize + 8 * B),
        )

        kernel = functools.partial(_fused_gather_loss_kernel,
                                   gather_chunk=gather_chunk,
                                   weights_sum_to_one=weights_sum_to_one)
        loss_col = pl.pallas_call(
            kernel,
            out_shape=jax.ShapeDtypeStruct((B, 1), jnp.float32),
            grid=grid,
            in_specs=[
                pl.BlockSpec((tr, C), lambda i: (i, 0)),      # outputs tile
                pl.BlockSpec((tr, 1), lambda i: (i, 0)),      # index tile
                pl.BlockSpec((n_pad, C), lambda i: (0, 0)),   # resident table
            ],
            out_specs=pl.BlockSpec((tr, 1), lambda i: (i, 0)),
            compiler_params=pltpu.CompilerParams(
                dimension_semantics=("parallel",),
                vmem_limit_bytes=vmem_limit,
            ),
            cost_estimate=cost,
        )(outputs, idx2, conf)
    else:
        # -------- streaming fallback: gather stays in XLA --------
        if targets is None:
            # NOTE: jnp.take clamps out-of-range indices (PyTorch would raise).
            weights = jnp.take(confidence, index, axis=0)     # (B, C)
        else:
            weights = targets
        w_esize = jnp.dtype(weights.dtype).itemsize

        dma_row = C * (x_esize + w_esize) + 4
        vmem_row = 2 * (C * (x_esize + w_esize) + 4) + 2 * C * 4
        tr = tile_rows or _auto_tile_rows(B, dma_row, vmem_row, 0, budget)
        tr = max(8, _round_up(int(tr), 8))
        grid = (pl.cdiv(B, tr),)

        working = vmem_row * tr
        vmem_limit = int(max(min(working + (8 << 20), budget), 16 << 20))
        cost = pl.CostEstimate(
            flops=int(6 * B * C),
            transcendentals=int(B * C),
            bytes_accessed=int(B * C * (x_esize + w_esize) + 4 * B),
        )

        kernel = functools.partial(_stream_loss_kernel,
                                   weights_sum_to_one=weights_sum_to_one)
        loss_col = pl.pallas_call(
            kernel,
            out_shape=jax.ShapeDtypeStruct((B, 1), jnp.float32),
            grid=grid,
            in_specs=[
                pl.BlockSpec((tr, C), lambda i: (i, 0)),
                pl.BlockSpec((tr, C), lambda i: (i, 0)),
            ],
            out_specs=pl.BlockSpec((tr, 1), lambda i: (i, 0)),
            compiler_params=pltpu.CompilerParams(
                dimension_semantics=("parallel",),
                vmem_limit_bytes=vmem_limit,
            ),
            cost_estimate=cost,
        )(outputs, weights)

    loss_vec = loss_col[:, 0]              # (B, 1) -> (B,)
    average_loss = jnp.mean(loss_vec)      # tiny reduction kept in the wrapper
    return average_loss, loss_vec


def _reference(outputs, confidence, index, targets=None):
    logsm = jax.nn.log_softmax(outputs.astype(jnp.float32), axis=1)
    w = confidence[index, :] if targets is None else targets
    loss_vec = -(logsm * w).sum(axis=1)
    return loss_vec.mean(), loss_vec


if __name__ == "__main__":
    key = jax.random.PRNGKey(0)
    k1, k2, k3 = jax.random.split(key, 3)

    N = 64      # dataset size (rows of confidence / train_givenY)
    C = 128     # number of classes (lane-dense)
    B = 16      # batch size

    # __init__: binary partial-label matrix with >=1 positive label per row,
    # row-normalized: confidence = train_givenY / train_givenY.sum(dim=1).
    given_y = (jax.random.uniform(k1, (N, C)) < 0.25).astype(jnp.float32)
    given_y = given_y.at[:, 0].set(1.0)
    confidence = given_y / jnp.sum(given_y, axis=1, keepdims=True)

    outputs = jax.random.normal(k2, (B, C), dtype=jnp.float32)
    index = jax.random.randint(k3, (B,), 0, N, dtype=jnp.int32)

    fwd = jax.jit(partial_loss_forward,
                  static_argnames=("tile_rows", "fuse_gather",
                                   "weights_sum_to_one"))

    # 1) fused in-kernel gather (confidence table resident in VMEM)
    avg_f, vec_f = fwd(outputs, confidence, index)
    # 2) streaming fallback (gather stays in XLA)
    avg_s, vec_s = fwd(outputs, confidence, index, fuse_gather=False)
    # 3) explicit-targets path
    targets = jnp.take(confidence, index, axis=0)
    avg_t, vec_t = fwd(outputs, confidence, index, targets)
    jax.block_until_ready((avg_f, vec_f, avg_s, vec_s, avg_t, vec_t))

    ref_avg, ref_vec = _reference(outputs, confidence, index)
    for avg, vec in ((avg_f, vec_f), (avg_s, vec_s), (avg_t, vec_t)):
        assert jnp.allclose(vec, ref_vec, atol=1e-5, rtol=1e-5)
        assert jnp.allclose(avg, ref_avg, atol=1e-5, rtol=1e-5)

    print("KERNEL_OK")
</pallas_src>

<mosaic_0001>
module attributes {stable_mosaic.version = 11 : i64} {
  func.func @_fused_gather_loss_kernel(%arg0: i32, %arg1: memref<8x128xf32, #tpu.memory_space<vmem>>, %arg2: memref<8x1xi32, #tpu.memory_space<vmem>>, %arg3: memref<64x128xf32, #tpu.memory_space<vmem>>, %arg4: memref<8x1xf32, #tpu.memory_space<vmem>>) attributes {dimension_semantics = [#tpu.dimension_semantics<parallel>], iteration_bounds = array<i64: 2>, scalar_prefetch = 0 : i64, scratch_operands = 0 : i64, tpu.core_type = #tpu.core_type<tc>, window_params = [{transform_indices = @transform_0, window_bounds = array<i64: 8, 128>}, {transform_indices = @transform_1, window_bounds = array<i64: 8, 1>}, {pipeline_mode = #tpu.pipeline_mode<synchronous>, transform_indices = @transform_2, window_bounds = array<i64: 64, 128>}, {transform_indices = @transform_3, window_bounds = array<i64: 8, 1>}]} {
    %c0 = arith.constant 0 : index
    %c0_0 = arith.constant 0 : index
    %0 = vector.load %arg1[%c0, %c0_0] : memref<8x128xf32, #tpu.memory_space<vmem>>, vector<8x128xf32>
    %c0_1 = arith.constant 0 : index
    %c0_2 = arith.constant 0 : index
    %1 = vector.load %arg2[%c0_1, %c0_2] : memref<8x1xi32, #tpu.memory_space<vmem>>, vector<8x1xi32>
    %cst = arith.constant 0.000000e+00 : f32
    %2 = vector.broadcast %cst : f32 to vector<8x128xf32>
    %3 = tpu.iota {dimensions = array<i32: 1>} : vector<8x64xi32>
    %c0_i32 = arith.constant 0 : i32
    %4 = vector.broadcast %c0_i32 : i32 to vector<8x64xi32>
    %5 = arith.addi %3, %4 : vector<8x64xi32>
    %6 = vector.broadcast %1 : vector<8x1xi32> to vector<8x64xi32>
    %7 = arith.cmpi eq, %6, %5 : vector<8x64xi32>
    %8 = arith.extui %7 : vector<8x64xi1> to vector<8x64xi32>
    %9 = arith.sitofp %8 : vector<8x64xi32> to vector<8x64xf32>
    %c0_3 = arith.constant 0 : index
    %c0_4 = arith.constant 0 : index
    %10 = vector.load %arg3[%c0_3, %c0_4] : memref<64x128xf32, #tpu.memory_space<vmem>>, vector<64x128xf32>
    %cst_5 = arith.constant dense<0.000000e+00> : vector<8x128xf32>
    %11 = tpu.matmul %9, %10, %cst_5 {dimension_numbers = #tpu.dot_dimension_numbers<[1], [0], [0], [1], [0, 0, 1, 1], [], []>, precision = #tpu.contract_precision<fp32>} : vector<8x64xf32>, vector<64x128xf32>, vector<8x128xf32> -> vector<8x128xf32>
    %12 = arith.addf %2, %11 : vector<8x128xf32>
    %cst_6 = arith.constant dense<0xFF800000> : vector<8xf32>
    %13 = vector.multi_reduction <maximumf>, %0, %cst_6 [1] : vector<8x128xf32> to vector<8xf32>
    %14 = vector.shape_cast %13 : vector<8xf32> to vector<8x1xf32>
    %15 = vector.broadcast %14 : vector<8x1xf32> to vector<8x128xf32>
    %16 = arith.subf %0, %15 : vector<8x128xf32>
    %17 = math.exp %16 : vector<8x128xf32>
    %cst_7 = arith.constant dense<0.000000e+00> : vector<8xf32>
    %18 = vector.multi_reduction <add>, %17, %cst_7 [1] : vector<8x128xf32> to vector<8xf32>
    %19 = vector.shape_cast %18 : vector<8xf32> to vector<8x1xf32>
    %20 = math.log %19 : vector<8x1xf32>
    %21 = arith.mulf %12, %0 : vector<8x128xf32>
    %cst_8 = arith.constant dense<0.000000e+00> : vector<8xf32>
    %22 = vector.multi_reduction <add>, %21, %cst_8 [1] : vector<8x128xf32> to vector<8xf32>
    %23 = vector.shape_cast %22 : vector<8xf32> to vector<8x1xf32>
    %cst_9 = arith.constant dense<0.000000e+00> : vector<8xf32>
    %24 = vector.multi_reduction <add>, %12, %cst_9 [1] : vector<8x128xf32> to vector<8xf32>
    %25 = vector.shape_cast %24 : vector<8xf32> to vector<8x1xf32>
    %26 = arith.addf %14, %20 : vector<8x1xf32>
    %27 = arith.mulf %25, %26 : vector<8x1xf32>
    %28 = arith.subf %27, %23 : vector<8x1xf32>
    %c0_10 = arith.constant 0 : index
    %c0_11 = arith.constant 0 : index
    %29 = vector.load %arg4[%c0_10, %c0_11] : memref<8x1xf32, #tpu.memory_space<vmem>>, vector<8x1xf32>
    tpu.vector_store %arg4[%c0_10, %c0_11], %28 {strides = array<i32>} : memref<8x1xf32, #tpu.memory_space<vmem>>, vector<8x1xf32>,
    return
  }
  func.func @transform_0(%arg0: i32) -> (i32, i32) {
    %c0_i32 = arith.constant 0 : i32
    %c0_i32_0 = arith.constant 0 : i32
    return %arg0, %c0_i32 : i32, i32
  }
  func.func @transform_1(%arg0: i32) -> (i32, i32) {
    %c0_i32 = arith.constant 0 : i32
    %c0_i32_0 = arith.constant 0 : i32
    return %arg0, %c0_i32 : i32, i32
  }
  func.func @transform_2(%arg0: i32) -> (i32, i32) {
    %c0_i32 = arith.constant 0 : i32
    %c0_i32_0 = arith.constant 0 : i32
    %c0_i32_1 = arith.constant 0 : i32
    return %c0_i32, %c0_i32_0 : i32, i32
  }
  func.func @transform_3(%arg0: i32) -> (i32, i32) {
    %c0_i32 = arith.constant 0 : i32
    %c0_i32_0 = arith.constant 0 : i32
    return %arg0, %c0_i32 : i32, i32
  }
}

</mosaic_0001>

<llo_original>
// kernel: partial_loss_forward.1
$region0: #{partial_loss_forward.1}
  #allocation0 [shape = 'u32[]', space=smem, size = 0x4, offset = 0x4, fixed_abs, tag = 'smem constant byte address 0x4 - core index']
  #allocation1 [shape = 'u32[144,128]{1,0:T(1,128)}', space=vmem, size = 0x12000, scoped, tag = 'internal scratch']
  %s0 = inlined_call_operand.vmem [shape: f32[16,128], index: 0, kind: input, shape index: {}]
  %s1 = inlined_call_operand.vmem [shape: s32[16,1], index: 1, kind: input, shape index: {}]
  %s2 = inlined_call_operand.hbm [shape: f32[64,128], index: 2, kind: input, shape index: {}]
  %s3 = inlined_call_operand.vmem [shape: f32[16,1], index: 3, kind: output, shape index: {}]
  %s4 = sld [smem:[#allocation0]]
  $region49: #{partial_loss_forward.1} parent=0
    _
  %s6 = ssub.s32 1, %s4
  %s7 = scalar_select 0, %s6, %s4
  $region1: #{partial_loss_forward.1} parent=0
    #allocation2 [shape = 'u8[32768]{0}', space=vmem, size = 0x8000, scoped, tag = 'input window, operand 2, single buffered']
    #allocation3 [shape = 's32[2]{0}', space=sflag, size = 0x8, scoped, tag = 'scoped memory for partial_loss_forward.1']
    %8 = vsyncpa [#allocation3], 0
    loop: start=0, step=1, limit=4
    $region2: #{partial_loss_forward.1} parent=1 // loop_pre_header
      _
    $region3: #{partial_loss_forward.1} parent=1 // loop_header
      %s10 = sphi 0, %s14
      %p11 = scmp.ge.s32.totalorder %s10, 4
      %s20 = sphi 0, %s22
      %s23 = sphi 0, %s20
      %s24 = sphi 0, %s23
      %s40 = sphi 0, %s24
      %s46 = sphi 0, %s48
      %s49 = sphi 0, %s46
      %s50 = sphi 0, %s49
      %s66 = sphi 0, %s50
      %s70 = sphi 0, %s70
      %s72 = sphi 0, %s70
      %s73 = sphi 0, %s72
      %s87 = sphi 0, %s73
      %s93 = sphi 0, %s95
      %s96 = sphi 0, %s93
      %s97 = sphi 0, %s96
      %s113 = sphi 0, %s97
    $region4: #{partial_loss_forward.1} parent=1 // loop_header_branch
      %13 = sbr.rel (%p11) target = $region8
    $region5: #{partial_loss_forward.1} parent=1 // loop_body
      %s15 = ssub.s32 %s10, 1
      %s16 = ssub.s32 %s10, 2
      %s17 = sadd.s32 %s10, 1
      %s18 = ssub.s32 %s10, %s17
      %p19 = scmp.eq.s32.totalorder %s18, 0
      %s21 = sadd.s32 %s20, 1
      %s22 = scalar_select %p19, %s20, %s21
      %p25 = pneg %p19
      %p26 = scmp.eq.s32.totalorder %s10, 1
      %p27 = por %p25, %p26
      %p28 = scmp.ne.s32.totalorder %s20, %s23
      %p29 = scmp.eq.s32.totalorder %s10, 0
      %p30 = por %p28, %p29
      %p31 = scmp.ne.s32.totalorder %s20, %s23
      %p32 = scmp.eq.s32.totalorder %s15, 1
      %p33 = por %p31, %p32
      %p34 = scmp.ne.s32.totalorder %s23, %s24
      %p35 = scmp.eq.s32.totalorder %s15, 0
      %p36 = por %p34, %p35
      %p37 = scmp.ne.s32.totalorder %s23, %s24
      %p38 = scmp.eq.s32.totalorder %s16, 1
      %p39 = por %p37, %p38
      %p41 = scmp.ne.s32.totalorder %s24, %s40
      %p42 = scmp.eq.s32.totalorder %s16, 0
      %p43 = por %p41, %p42
      %s44 = ssub.s32 %s10, %s17
      %p45 = scmp.eq.s32.totalorder %s44, 0
      %s47 = sadd.s32 %s46, 1
      %s48 = scalar_select %p45, %s46, %s47
      %p51 = pneg %p45
      %p52 = scmp.eq.s32.totalorder %s10, 1
      %p53 = por %p51, %p52
      %p54 = scmp.ne.s32.totalorder %s46, %s49
      %p55 = scmp.eq.s32.totalorder %s10, 0
      %p56 = por %p54, %p55
      %p57 = scmp.ne.s32.totalorder %s46, %s49
      %p58 = scmp.eq.s32.totalorder %s15, 1
      %p59 = por %p57, %p58
      %p60 = scmp.ne.s32.totalorder %s49, %s50
      %p61 = scmp.eq.s32.totalorder %s15, 0
      %p62 = por %p60, %p61
      %p63 = scmp.ne.s32.totalorder %s49, %s50
      %p64 = scmp.eq.s32.totalorder %s16, 1
      %p65 = por %p63, %p64
      %p67 = scmp.ne.s32.totalorder %s50, %s66
      %p68 = scmp.eq.s32.totalorder %s16, 0
      %p69 = por %p67, %p68
      %s71 = sadd.s32 %s70, 1
      %p74 = scmp.eq.s32.totalorder %s10, 1
      %p75 = scmp.ne.s32.totalorder %s70, %s72
      %p76 = scmp.eq.s32.totalorder %s10, 0
      %p77 = por %p75, %p76
      %p78 = scmp.ne.s32.totalorder %s70, %s72
      %p79 = scmp.eq.s32.totalorder %s15, 1
      %p80 = por %p78, %p79
      %p81 = scmp.ne.s32.totalorder %s72, %s73
      %p82 = scmp.eq.s32.totalorder %s15, 0
      %p83 = por %p81, %p82
      %p84 = scmp.ne.s32.totalorder %s72, %s73
      %p85 = scmp.eq.s32.totalorder %s16, 1
      %p86 = por %p84, %p85
      %p88 = scmp.ne.s32.totalorder %s73, %s87
      %p89 = scmp.eq.s32.totalorder %s16, 0
      %p90 = por %p88, %p89
      %s91 = ssub.s32 %s10, %s17
      %p92 = scmp.eq.s32.totalorder %s91, 0
      %s94 = sadd.s32 %s93, 1
      %s95 = scalar_select %p92, %s93, %s94
      %p98 = pneg %p92
      %p99 = scmp.eq.s32.totalorder %s10, 1
      %p100 = por %p98, %p99
      %p101 = scmp.ne.s32.totalorder %s93, %s96
      %p102 = scmp.eq.s32.totalorder %s10, 0
      %p103 = por %p101, %p102
      %p104 = scmp.ne.s32.totalorder %s93, %s96
      %p105 = scmp.eq.s32.totalorder %s15, 1
      %p106 = por %p104, %p105
      %p107 = scmp.ne.s32.totalorder %s96, %s97
      %p108 = scmp.eq.s32.totalorder %s15, 0
      %p109 = por %p107, %p108
      %p110 = scmp.ne.s32.totalorder %s96, %s97
      %p111 = scmp.eq.s32.totalorder %s16, 1
      %p112 = por %p110, %p111
      %p114 = scmp.ne.s32.totalorder %s97, %s113
      %p115 = scmp.eq.s32.totalorder %s16, 0
      %p116 = por %p114, %p115
      %p117 = scmp.le.s32.totalorder 1, %s10
      %p118 = scmp.lt.s32.totalorder %s10, 3
      %p119 = pnand %p117, %p118
      %p120 = pneg %p119
      // Predicated region
      $region9: #{partial_loss_forward.1} parent=5 // pred_check
        _
      $region10: #{partial_loss_forward.1} parent=5 // pred_check_branch
        %122 = sbr.rel (%p119) target = $region12
      $region11: #{partial_loss_forward.1} parent=5 // pred_region
        %s123 = ssub.s32 %s10, 1
        // Predicated region
        $region13: #{partial_loss_forward.1} parent=11 // pred_check
          %p124 = pneg %p83
        $region14: #{partial_loss_forward.1} parent=11 // pred_check_branch
          %126 = sbr.rel (%p124) target = $region16
        $region15: #{partial_loss_forward.1} parent=11 // pred_region
          %s128 = ssub.s32 1024, 1024
          %129 = vsyncadd [#allocation3], %s128
          %s130 = sshll.u32 [#allocation2], 4
          %s131 = int_to_ptr.vmem [resolvable:$true] %s130
          %136 = dma.hbm_to_vmem [thread:$0]  %s2, 1024, %s131, [#allocation3], 128, 128, 8
        $region16: #{partial_loss_forward.1} parent=11 // pred_fallthru
          _
      $region12: #{partial_loss_forward.1} parent=5 // pred_fallthru
        _
      %p137 = scmp.lt.s32.totalorder %s10, 2
      // Predicated region
      $region17: #{partial_loss_forward.1} parent=5 // pred_check
        %p138 = pneg %p137
      $region18: #{partial_loss_forward.1} parent=5 // pred_check_branch
        %140 = sbr.rel (%p138) target = $region20
      $region19: #{partial_loss_forward.1} parent=5 // pred_region
        // Predicated region
        $region21: #{partial_loss_forward.1} parent=19 // pred_check
          %p141 = pneg %p30
        $region22: #{partial_loss_forward.1} parent=19 // pred_check_branch
          %143 = sbr.rel (%p141) target = $region24
        $region23: #{partial_loss_forward.1} parent=19 // pred_region
          %p144 = scmp.lt.s32.totalorder %s10, 1
          %s145 = scalar_select %p144, %s10, 1
          %s146 = smul.addr %s145, 8
          %s147 = scalar_lea.vmem %s0, %s146
        $region24: #{partial_loss_forward.1} parent=19 // pred_fallthru
          _
        // Predicated region
        $region25: #{partial_loss_forward.1} parent=19 // pred_check
          %p148 = pneg %p56
        $region26: #{partial_loss_forward.1} parent=19 // pred_check_branch
          %150 = sbr.rel (%p148) target = $region28
        $region27: #{partial_loss_forward.1} parent=19 // pred_region
          %p151 = scmp.lt.s32.totalorder %s10, 1
          %s152 = scalar_select %p151, %s10, 1
          %s153 = smul.addr %s152, 8
          %s154 = scalar_lea.vmem %s1, %s153
        $region28: #{partial_loss_forward.1} parent=19 // pred_fallthru
          _
      $region20: #{partial_loss_forward.1} parent=5 // pred_fallthru
        _
      %p155 = scmp.le.s32.totalorder 1, %s10
      %p156 = scmp.lt.s32.totalorder %s10, 3
      %p157 = pnand %p155, %p156
      %p158 = pneg %p157
      // Predicated region
      $region29: #{partial_loss_forward.1} parent=5 // pred_check
        _
      $region30: #{partial_loss_forward.1} parent=5 // pred_check_branch
        %160 = sbr.rel (%p157) target = $region32
      $region31: #{partial_loss_forward.1} parent=5 // pred_region
        %s161 = ssub.s32 %s10, 1
        // Predicated region
        $region33: #{partial_loss_forward.1} parent=31 // pred_check
          %p162 = pneg %p83
        $region34: #{partial_loss_forward.1} parent=31 // pred_check_branch
          %164 = sbr.rel (%p162) target = $region36
        $region35: #{partial_loss_forward.1} parent=31 // pred_region
          %165 = dma.done [#allocation3], 1024
        $region36: #{partial_loss_forward.1} parent=31 // pred_fallthru
          _
        %p166 = scmp.lt.s32.totalorder %s15, 1
        %s167 = scalar_select %p166, %s15, 1
        %s168 = smul.addr %s167, 8
        %s169 = scalar_lea.vmem %s0, %s168
        %p170 = pneg %p36
        %p171 = pneg %p33
        %p172 = scmp.lt.s32.totalorder %s15, 1
        %s173 = scalar_select %p172, %s15, 1
        %s174 = smul.addr %s173, 8
        %s175 = scalar_lea.vmem %s1, %s174
        %p176 = pneg %p62
        %p177 = pneg %p59
        %p178 = pneg %p83
        %p179 = pneg %p80
        %p180 = pneg %p109
        %p181 = pneg %p106
        %p182 = scmp.lt.s32.totalorder %s15, 1
        %s183 = scalar_select %p182, %s15, 1
        %s184 = smul.addr %s183, 8
        %s185 = scalar_lea.vmem %s3, %s184
        %p186 = scmp.lt.s32.totalorder %s15, 1
        %s187 = scalar_select %p186, %s15, 1
        %s188 = smul.addr %s187, 8
        %s189 = scalar_lea.vmem %s0, %s188
        %p190 = scmp.lt.s32.totalorder %s15, 1
        %s191 = scalar_select %p190, %s15, 1
        %s192 = smul.addr %s191, 8
        %s193 = scalar_lea.vmem %s1, %s192
        %p194 = scmp.lt.s32.totalorder %s15, 1
        %s195 = scalar_select %p194, %s15, 1
        %s196 = smul.addr %s195, 8
        %s197 = scalar_lea.vmem %s3, %s196
        %v198 = vld [vmem:[%s189] sm:$0xff]
        %v199 = vld [vmem:[%s193] sm:$0xff]
        %v200 = vlaneseq
        %v201 = vand.u32 %v200, 127
        %202 = vset.pattern.permute.xlu0 0
        %203 = vperm.xlu0 %202, %v199
        %v204 = vpop.permute.xlu0 %203
        %vm205 = vcmp.eq.s32.totalorder %v204, %v201
        %v206 = vsel %vm205, 1, 0
        %v207 = vcvt.s32.f32 %v206
        %v208 = vld [vmem:[#allocation2] sm:$0xff]
        %v209 = vld [vmem:[#allocation2 + $0x8] sm:$0xff]
        %v210 = vld [vmem:[#allocation2 + $0x10] sm:$0xff]
        %v211 = vld [vmem:[#allocation2 + $0x18] sm:$0xff]
        %v212 = vld [vmem:[#allocation2 + $0x20] sm:$0xff]
        %v213 = vld [vmem:[#allocation2 + $0x28] sm:$0xff]
        %v214 = vld [vmem:[#allocation2 + $0x30] sm:$0xff]
        %v215 = vld [vmem:[#allocation2 + $0x38] sm:$0xff]
        %vm216 = vcmask 523264
        %v218 = vsel %vm216, %v207, 0
        %220 = vmatprep.subr.mxu0 0.0
        %221 = vmatpush1.msra.mxu0 0.0
        %222 = vmatprep.subr.mxu0 0.0
        %223 = vmatpush1.msra.mxu0 0.0
        %224 = vmatprep.subr.mxu0 0.0
        %225 = vmatpush1.msra.mxu0 0.0
        %226 = vmatprep.subr.mxu0 0.0
        %227 = vmatpush1.msra.mxu0 0.0
        %228 = vmatprep.subr.mxu0 0.0
        %229 = vmatpush1.msra.mxu0 0.0
        %230 = vmatprep.subr.mxu0 0.0
        %231 = vmatpush1.msra.mxu0 0.0
        %232 = vmatprep.subr.mxu0 0.0
        %233 = vmatpush1.msra.mxu0 0.0
        %234 = vmatprep.subr.mxu0 0.0
        %235 = vmatpush1.msra.mxu0 0.0
        %236 = vmatprep.subr.mxu0 0.0
        %v237 = vand.u32 %v215, 4294901760
        %238 = vmatpush1.msra.mxu0 %v237
        %239 = vmatprep.subr.mxu0 0.0
        %v240 = vand.u32 %v214, 4294901760
        %241 = vmatpush1.msra.mxu0 %v240
        %242 = vmatprep.subr.mxu0 0.0
        %v243 = vand.u32 %v213, 4294901760
        %244 = vmatpush1.msra.mxu0 %v243
        %245 = vmatprep.subr.mxu0 0.0
        %v246 = vand.u32 %v212, 4294901760
        %247 = vmatpush1.msra.mxu0 %v246
        %248 = vmatprep.subr.mxu0 0.0
        %v249 = vand.u32 %v211, 4294901760
        %250 = vmatpush1.msra.mxu0 %v249
        %251 = vmatprep.subr.mxu0 0.0
        %v252 = vand.u32 %v210, 4294901760
        %253 = vmatpush1.msra.mxu0 %v252
        %254 = vmatprep.subr.mxu0 0.0
        %v255 = vand.u32 %v209, 4294901760
        %256 = vmatpush1.msra.mxu0 %v255
        %257 = vmatprep.subr.mxu0 0.0
        %v258 = vand.u32 %v208, 4294901760
        %259 = vmatpush1.msra.mxu0 %v258
        %260 = vmatprep.subr.mxu0 0.0
        %261 = vmatpush2.msra.mxu0 0.0
        %262 = vmatprep.subr.mxu0 0.0
        %263 = vmatpush2.msra.mxu0 0.0
        %264 = vmatprep.subr.mxu0 0.0
        %265 = vmatpush2.msra.mxu0 0.0
        %266 = vmatprep.subr.mxu0 0.0
        %267 = vmatpush2.msra.mxu0 0.0
        %268 = vmatprep.subr.mxu0 0.0
        %269 = vmatpush2.msra.mxu0 0.0
        %270 = vmatprep.subr.mxu0 0.0
        %271 = vmatpush2.msra.mxu0 0.0
        %272 = vmatprep.subr.mxu0 0.0
        %273 = vmatpush2.msra.mxu0 0.0
        %274 = vmatprep.subr.mxu0 0.0
        %275 = vmatpush2.msra.mxu0 0.0
        %276 = vmatprep.subr.mxu0 0.0
        %277 = vmatpush2.msra.mxu0 0.0
        %278 = vmatprep.subr.mxu0 0.0
        %279 = vmatpush2.msra.mxu0 0.0
        %280 = vmatprep.subr.mxu0 0.0
        %281 = vmatpush2.msra.mxu0 0.0
        %282 = vmatprep.subr.mxu0 0.0
        %283 = vmatpush2.msra.mxu0 0.0
        %284 = vmatprep.subr.mxu0 0.0
        %285 = vmatpush2.msra.mxu0 0.0
        %286 = vmatprep.subr.mxu0 0.0
        %287 = vmatpush2.msra.mxu0 0.0
        %288 = vmatprep.subr.mxu0 0.0
        %289 = vmatpush2.msra.mxu0 0.0
        %290 = vmatprep.subr.mxu0 0.0
        %291 = vmatpush2.msra.mxu0 0.0
        %292 = vmatprep.mubr.f32.mxu0 0.0
        %v293 = vand.u32 %v218, 4294901760
        %v294 = vsub.f32 %v218, %v293
        %v295 = vand.u32 %v294, 4294901760
        %v296 = vsub.f32 %v294, %v295
        %v297 = vand.u32 %v296, 4294901760
        %298 = vmatmul.mubr.f32.gmra.mxu0 %v297
        %v299 = vpop.f32.mrf.mxu0
        %v300 = vadd.f32 0.0, %v299
        %v301 = vpop.f32.mrf.mxu0
        %302 = vdwg.mxu0
        %303 = vmatprep.subr.mxu0 0.0
        %304 = vmatpush1.msra.mxu0 0.0
        %305 = vmatprep.subr.mxu0 0.0
        %306 = vmatpush1.msra.mxu0 0.0
        %307 = vmatprep.subr.mxu0 0.0
        %308 = vmatpush1.msra.mxu0 0.0
        %309 = vmatprep.subr.mxu0 0.0
        %310 = vmatpush1.msra.mxu0 0.0
        %311 = vmatprep.subr.mxu0 0.0
        %312 = vmatpush1.msra.mxu0 0.0
        %313 = vmatprep.subr.mxu0 0.0
        %314 = vmatpush1.msra.mxu0 0.0
        %315 = vmatprep.subr.mxu0 0.0
        %316 = vmatpush1.msra.mxu0 0.0
        %317 = vmatprep.subr.mxu0 0.0
        %318 = vmatpush1.msra.mxu0 0.0
        %319 = vmatprep.subr.mxu0 0.0
        %v320 = vand.u32 %v215, 4294901760
        %v321 = vsub.f32 %v215, %v320
        %v322 = vand.u32 %v321, 4294901760
        %v323 = vsub.f32 %v321, %v322
        %v324 = vand.u32 %v323, 4294901760
        %325 = vmatpush1.msra.mxu0 %v324
        %326 = vmatprep.subr.mxu0 0.0
        %v327 = vand.u32 %v214, 4294901760
        %v328 = vsub.f32 %v214, %v327
        %v329 = vand.u32 %v328, 4294901760
        %v330 = vsub.f32 %v328, %v329
        %v331 = vand.u32 %v330, 4294901760
        %332 = vmatpush1.msra.mxu0 %v331
        %333 = vmatprep.subr.mxu0 0.0
        %v334 = vand.u32 %v213, 4294901760
        %v335 = vsub.f32 %v213, %v334
        %v336 = vand.u32 %v335, 4294901760
        %v337 = vsub.f32 %v335, %v336
        %v338 = vand.u32 %v337, 4294901760
        %339 = vmatpush1.msra.mxu0 %v338
        %340 = vmatprep.subr.mxu0 0.0
        %v341 = vand.u32 %v212, 4294901760
        %v342 = vsub.f32 %v212, %v341
        %v343 = vand.u32 %v342, 4294901760
        %v344 = vsub.f32 %v342, %v343
        %v345 = vand.u32 %v344, 4294901760
        %346 = vmatpush1.msra.mxu0 %v345
        %347 = vmatprep.subr.mxu0 0.0
        %v348 = vand.u32 %v211, 4294901760
        %v349 = vsub.f32 %v211, %v348
        %v350 = vand.u32 %v349, 4294901760
        %v351 = vsub.f32 %v349, %v350
        %v352 = vand.u32 %v351, 4294901760
        %353 = vmatpush1.msra.mxu0 %v352
        %354 = vmatprep.subr.mxu0 0.0
        %v355 = vand.u32 %v210, 4294901760
        %v356 = vsub.f32 %v210, %v355
        %v357 = vand.u32 %v356, 4294901760
        %v358 = vsub.f32 %v356, %v357
        %v359 = vand.u32 %v358, 4294901760
        %360 = vmatpush1.msra.mxu0 %v359
        %361 = vmatprep.subr.mxu0 0.0
        %v362 = vand.u32 %v209, 4294901760
        %v363 = vsub.f32 %v209, %v362
        %v364 = vand.u32 %v363, 4294901760
        %v365 = vsub.f32 %v363, %v364
        %v366 = vand.u32 %v365, 4294901760
        %367 = vmatpush1.msra.mxu0 %v366
        %368 = vmatprep.subr.mxu0 0.0
        %v369 = vand.u32 %v208, 4294901760
        %v370 = vsub.f32 %v208, %v369
        %v371 = vand.u32 %v370, 4294901760
        %v372 = vsub.f32 %v370, %v371
        %v373 = vand.u32 %v372, 4294901760
        %374 = vmatpush1.msra.mxu0 %v373
        %375 = vmatprep.subr.mxu0 0.0
        %376 = vmatpush2.msra.mxu0 0.0
        %377 = vmatprep.subr.mxu0 0.0
        %378 = vmatpush2.msra.mxu0 0.0
        %379 = vmatprep.subr.mxu0 0.0
        %380 = vmatpush2.msra.mxu0 0.0
        %381 = vmatprep.subr.mxu0 0.0
        %382 = vmatpush2.msra.mxu0 0.0
        %383 = vmatprep.subr.mxu0 0.0
        %384 = vmatpush2.msra.mxu0 0.0
        %385 = vmatprep.subr.mxu0 0.0
        %386 = vmatpush2.msra.mxu0 0.0
        %387 = vmatprep.subr.mxu0 0.0
        %388 = vmatpush2.msra.mxu0 0.0
        %389 = vmatprep.subr.mxu0 0.0
        %390 = vmatpush2.msra.mxu0 0.0
        %391 = vmatprep.subr.mxu0 0.0
        %392 = vmatpush2.msra.mxu0 0.0
        %393 = vmatprep.subr.mxu0 0.0
        %394 = vmatpush2.msra.mxu0 0.0
        %395 = vmatprep.subr.mxu0 0.0
        %396 = vmatpush2.msra.mxu0 0.0
        %397 = vmatprep.subr.mxu0 0.0
        %398 = vmatpush2.msra.mxu0 0.0
        %399 = vmatprep.subr.mxu0 0.0
        %400 = vmatpush2.msra.mxu0 0.0
        %401 = vmatprep.subr.mxu0 0.0
        %402 = vmatpush2.msra.mxu0 0.0
        %403 = vmatprep.subr.mxu0 0.0
        %404 = vmatpush2.msra.mxu0 0.0
        %405 = vmatprep.subr.mxu0 0.0
        %406 = vmatpush2.msra.mxu0 0.0
        %407 = vmatprep.mubr.f32.mxu0 0.0
        %v408 = vand.u32 %v218, 4294901760
        %409 = vmatmul.mubr.f32.gmra.mxu0 %v408
        %v410 = vpop.f32.mrf.mxu0
        %v411 = vadd.f32 %v300, %v410
        %v412 = vpop.f32.mrf.mxu0
        %413 = vdwg.mxu0
        %414 = vmatprep.subr.mxu0 0.0
        %415 = vmatpush1.msra.mxu0 0.0
        %416 = vmatprep.subr.mxu0 0.0
        %417 = vmatpush1.msra.mxu0 0.0
        %418 = vmatprep.subr.mxu0 0.0
        %419 = vmatpush1.msra.mxu0 0.0
        %420 = vmatprep.subr.mxu0 0.0
        %421 = vmatpush1.msra.mxu0 0.0
        %422 = vmatprep.subr.mxu0 0.0
        %423 = vmatpush1.msra.mxu0 0.0
        %424 = vmatprep.subr.mxu0 0.0
        %425 = vmatpush1.msra.mxu0 0.0
        %426 = vmatprep.subr.mxu0 0.0
        %427 = vmatpush1.msra.mxu0 0.0
        %428 = vmatprep.subr.mxu0 0.0
        %429 = vmatpush1.msra.mxu0 0.0
        %430 = vmatprep.subr.mxu0 0.0
        %v431 = vand.u32 %v215, 4294901760
        %v432 = vsub.f32 %v215, %v431
        %433 = vmatpush1.msra.mxu0 %v432
        %434 = vmatprep.subr.mxu0 0.0
        %v435 = vand.u32 %v214, 4294901760
        %v436 = vsub.f32 %v214, %v435
        %437 = vmatpush1.msra.mxu0 %v436
        %438 = vmatprep.subr.mxu0 0.0
        %v439 = vand.u32 %v213, 4294901760
        %v440 = vsub.f32 %v213, %v439
        %441 = vmatpush1.msra.mxu0 %v440
        %442 = vmatprep.subr.mxu0 0.0
        %v443 = vand.u32 %v212, 4294901760
        %v444 = vsub.f32 %v212, %v443
        %445 = vmatpush1.msra.mxu0 %v444
        %446 = vmatprep.subr.mxu0 0.0
        %v447 = vand.u32 %v211, 4294901760
        %v448 = vsub.f32 %v211, %v447
        %449 = vmatpush1.msra.mxu0 %v448
        %450 = vmatprep.subr.mxu0 0.0
        %v451 = vand.u32 %v210, 4294901760
        %v452 = vsub.f32 %v210, %v451
        %453 = vmatpush1.msra.mxu0 %v452
        %454 = vmatprep.subr.mxu0 0.0
        %v455 = vand.u32 %v209, 4294901760
        %v456 = vsub.f32 %v209, %v455
        %457 = vmatpush1.msra.mxu0 %v456
        %458 = vmatprep.subr.mxu0 0.0
        %v459 = vand.u32 %v208, 4294901760
        %v460 = vsub.f32 %v208, %v459
        %461 = vmatpush1.msra.mxu0 %v460
        %462 = vmatprep.subr.mxu0 0.0
        %463 = vmatpush2.msra.mxu0 0.0
        %464 = vmatprep.subr.mxu0 0.0
        %465 = vmatpush2.msra.mxu0 0.0
        %466 = vmatprep.subr.mxu0 0.0
        %467 = vmatpush2.msra.mxu0 0.0
        %468 = vmatprep.subr.mxu0 0.0
        %469 = vmatpush2.msra.mxu0 0.0
        %470 = vmatprep.subr.mxu0 0.0
        %471 = vmatpush2.msra.mxu0 0.0
        %472 = vmatprep.subr.mxu0 0.0
        %473 = vmatpush2.msra.mxu0 0.0
        %474 = vmatprep.subr.mxu0 0.0
        %475 = vmatpush2.msra.mxu0 0.0
        %476 = vmatprep.subr.mxu0 0.0
        %477 = vmatpush2.msra.mxu0 0.0
        %478 = vmatprep.subr.mxu0 0.0
        %479 = vmatpush2.msra.mxu0 0.0
        %480 = vmatprep.subr.mxu0 0.0
        %481 = vmatpush2.msra.mxu0 0.0
        %482 = vmatprep.subr.mxu0 0.0
        %483 = vmatpush2.msra.mxu0 0.0
        %484 = vmatprep.subr.mxu0 0.0
        %485 = vmatpush2.msra.mxu0 0.0
        %486 = vmatprep.subr.mxu0 0.0
        %487 = vmatpush2.msra.mxu0 0.0
        %488 = vmatprep.subr.mxu0 0.0
        %489 = vmatpush2.msra.mxu0 0.0
        %490 = vmatprep.subr.mxu0 0.0
        %491 = vmatpush2.msra.mxu0 0.0
        %492 = vmatprep.subr.mxu0 0.0
        %493 = vmatpush2.msra.mxu0 0.0
        %494 = vmatprep.mubr.f32.mxu0 0.0
        %v495 = vand.u32 %v218, 4294901760
        %v496 = vsub.f32 %v218, %v495
        %497 = vmatmul.mubr.f32.gmra.mxu0 %v496
        %v498 = vpop.f32.mrf.mxu0
        %v499 = vadd.f32 %v411, %v498
        %v500 = vpop.f32.mrf.mxu0
        %501 = vdwg.mxu0
        %502 = vmatprep.subr.mxu0 0.0
        %503 = vmatpush1.msra.mxu0 0.0
        %504 = vmatprep.subr.mxu0 0.0
        %505 = vmatpush1.msra.mxu0 0.0
        %506 = vmatprep.subr.mxu0 0.0
        %507 = vmatpush1.msra.mxu0 0.0
        %508 = vmatprep.subr.mxu0 0.0
        %509 = vmatpush1.msra.mxu0 0.0
        %510 = vmatprep.subr.mxu0 0.0
        %511 = vmatpush1.msra.mxu0 0.0
        %512 = vmatprep.subr.mxu0 0.0
        %513 = vmatpush1.msra.mxu0 0.0
        %514 = vmatprep.subr.mxu0 0.0
        %515 = vmatpush1.msra.mxu0 0.0
        %516 = vmatprep.subr.mxu0 0.0
        %517 = vmatpush1.msra.mxu0 0.0
        %518 = vmatprep.subr.mxu0 0.0
        %v519 = vand.u32 %v215, 4294901760
        %520 = vmatpush1.msra.mxu0 %v519
        %521 = vmatprep.subr.mxu0 0.0
        %v522 = vand.u32 %v214, 4294901760
        %523 = vmatpush1.msra.mxu0 %v522
        %524 = vmatprep.subr.mxu0 0.0
        %v525 = vand.u32 %v213, 4294901760
        %526 = vmatpush1.msra.mxu0 %v525
        %527 = vmatprep.subr.mxu0 0.0
        %v528 = vand.u32 %v212, 4294901760
        %529 = vmatpush1.msra.mxu0 %v528
        %530 = vmatprep.subr.mxu0 0.0
        %v531 = vand.u32 %v211, 4294901760
        %532 = vmatpush1.msra.mxu0 %v531
        %533 = vmatprep.subr.mxu0 0.0
        %v534 = vand.u32 %v210, 4294901760
        %535 = vmatpush1.msra.mxu0 %v534
        %536 = vmatprep.subr.mxu0 0.0
        %v537 = vand.u32 %v209, 4294901760
        %538 = vmatpush1.msra.mxu0 %v537
        %539 = vmatprep.subr.mxu0 0.0
        %v540 = vand.u32 %v208, 4294901760
        %541 = vmatpush1.msra.mxu0 %v540
        %542 = vmatprep.subr.mxu0 0.0
        %543 = vmatpush2.msra.mxu0 0.0
        %544 = vmatprep.subr.mxu0 0.0
        %545 = vmatpush2.msra.mxu0 0.0
        %546 = vmatprep.subr.mxu0 0.0
        %547 = vmatpush2.msra.mxu0 0.0
        %548 = vmatprep.subr.mxu0 0.0
        %549 = vmatpush2.msra.mxu0 0.0
        %550 = vmatprep.subr.mxu0 0.0
        %551 = vmatpush2.msra.mxu0 0.0
        %552 = vmatprep.subr.mxu0 0.0
        %553 = vmatpush2.msra.mxu0 0.0
        %554 = vmatprep.subr.mxu0 0.0
        %555 = vmatpush2.msra.mxu0 0.0
        %556 = vmatprep.subr.mxu0 0.0
        %557 = vmatpush2.msra.mxu0 0.0
        %558 = vmatprep.subr.mxu0 0.0
        %559 = vmatpush2.msra.mxu0 0.0
        %560 = vmatprep.subr.mxu0 0.0
        %561 = vmatpush2.msra.mxu0 0.0
        %562 = vmatprep.subr.mxu0 0.0
        %563 = vmatpush2.msra.mxu0 0.0
        %564 = vmatprep.subr.mxu0 0.0
        %565 = vmatpush2.msra.mxu0 0.0
        %566 = vmatprep.subr.mxu0 0.0
        %567 = vmatpush2.msra.mxu0 0.0
        %568 = vmatprep.subr.mxu0 0.0
        %569 = vmatpush2.msra.mxu0 0.0
        %570 = vmatprep.subr.mxu0 0.0
        %571 = vmatpush2.msra.mxu0 0.0
        %572 = vmatprep.subr.mxu0 0.0
        %573 = vmatpush2.msra.mxu0 0.0
        %574 = vmatprep.mubr.f32.mxu0 0.0
        %v575 = vand.u32 %v218, 4294901760
        %v576 = vsub.f32 %v218, %v575
        %v577 = vand.u32 %v576, 4294901760
        %578 = vmatmul.mubr.f32.gmra.mxu0 %v577
        %v579 = vpop.f32.mrf.mxu0
        %v580 = vadd.f32 %v499, %v579
        %v581 = vpop.f32.mrf.mxu0
        %582 = vdwg.mxu0
        %583 = vmatprep.subr.mxu0 0.0
        %584 = vmatpush1.msra.mxu0 0.0
        %585 = vmatprep.subr.mxu0 0.0
        %586 = vmatpush1.msra.mxu0 0.0
        %587 = vmatprep.subr.mxu0 0.0
        %588 = vmatpush1.msra.mxu0 0.0
        %589 = vmatprep.subr.mxu0 0.0
        %590 = vmatpush1.msra.mxu0 0.0
        %591 = vmatprep.subr.mxu0 0.0
        %592 = vmatpush1.msra.mxu0 0.0
        %593 = vmatprep.subr.mxu0 0.0
        %594 = vmatpush1.msra.mxu0 0.0
        %595 = vmatprep.subr.mxu0 0.0
        %596 = vmatpush1.msra.mxu0 0.0
        %597 = vmatprep.subr.mxu0 0.0
        %598 = vmatpush1.msra.mxu0 0.0
        %599 = vmatprep.subr.mxu0 0.0
        %v600 = vand.u32 %v215, 4294901760
        %v601 = vsub.f32 %v215, %v600
        %v602 = vand.u32 %v601, 4294901760
        %603 = vmatpush1.msra.mxu0 %v602
        %604 = vmatprep.subr.mxu0 0.0
        %v605 = vand.u32 %v214, 4294901760
        %v606 = vsub.f32 %v214, %v605
        %v607 = vand.u32 %v606, 4294901760
        %608 = vmatpush1.msra.mxu0 %v607
        %609 = vmatprep.subr.mxu0 0.0
        %v610 = vand.u32 %v213, 4294901760
        %v611 = vsub.f32 %v213, %v610
        %v612 = vand.u32 %v611, 4294901760
        %613 = vmatpush1.msra.mxu0 %v612
        %614 = vmatprep.subr.mxu0 0.0
        %v615 = vand.u32 %v212, 4294901760
        %v616 = vsub.f32 %v212, %v615
        %v617 = vand.u32 %v616, 4294901760
        %618 = vmatpush1.msra.mxu0 %v617
        %619 = vmatprep.subr.mxu0 0.0
        %v620 = vand.u32 %v211, 4294901760
        %v621 = vsub.f32 %v211, %v620
        %v622 = vand.u32 %v621, 4294901760
        %623 = vmatpush1.msra.mxu0 %v622
        %624 = vmatprep.subr.mxu0 0.0
        %v625 = vand.u32 %v210, 4294901760
        %v626 = vsub.f32 %v210, %v625
        %v627 = vand.u32 %v626, 4294901760
        %628 = vmatpush1.msra.mxu0 %v627
        %629 = vmatprep.subr.mxu0 0.0
        %v630 = vand.u32 %v209, 4294901760
        %v631 = vsub.f32 %v209, %v630
        %v632 = vand.u32 %v631, 4294901760
        %633 = vmatpush1.msra.mxu0 %v632
        %634 = vmatprep.subr.mxu0 0.0
        %v635 = vand.u32 %v208, 4294901760
        %v636 = vsub.f32 %v208, %v635
        %v637 = vand.u32 %v636, 4294901760
        %638 = vmatpush1.msra.mxu0 %v637
        %639 = vmatprep.subr.mxu0 0.0
        %640 = vmatpush2.msra.mxu0 0.0
        %641 = vmatprep.subr.mxu0 0.0
        %642 = vmatpush2.msra.mxu0 0.0
        %643 = vmatprep.subr.mxu0 0.0
        %644 = vmatpush2.msra.mxu0 0.0
        %645 = vmatprep.subr.mxu0 0.0
        %646 = vmatpush2.msra.mxu0 0.0
        %647 = vmatprep.subr.mxu0 0.0
        %648 = vmatpush2.msra.mxu0 0.0
        %649 = vmatprep.subr.mxu0 0.0
        %650 = vmatpush2.msra.mxu0 0.0
        %651 = vmatprep.subr.mxu0 0.0
        %652 = vmatpush2.msra.mxu0 0.0
        %653 = vmatprep.subr.mxu0 0.0
        %654 = vmatpush2.msra.mxu0 0.0
        %655 = vmatprep.subr.mxu0 0.0
        %656 = vmatpush2.msra.mxu0 0.0
        %657 = vmatprep.subr.mxu0 0.0
        %658 = vmatpush2.msra.mxu0 0.0
        %659 = vmatprep.subr.mxu0 0.0
        %660 = vmatpush2.msra.mxu0 0.0
        %661 = vmatprep.subr.mxu0 0.0
        %662 = vmatpush2.msra.mxu0 0.0
        %663 = vmatprep.subr.mxu0 0.0
        %664 = vmatpush2.msra.mxu0 0.0
        %665 = vmatprep.subr.mxu0 0.0
        %666 = vmatpush2.msra.mxu0 0.0
        %667 = vmatprep.subr.mxu0 0.0
        %668 = vmatpush2.msra.mxu0 0.0
        %669 = vmatprep.subr.mxu0 0.0
        %670 = vmatpush2.msra.mxu0 0.0
        %671 = vmatprep.mubr.f32.mxu0 0.0
        %v672 = vand.u32 %v218, 4294901760
        %673 = vmatmul.mubr.f32.gmra.mxu0 %v672
        %v674 = vpop.f32.mrf.mxu0
        %v675 = vadd.f32 %v580, %v674
        %v676 = vpop.f32.mrf.mxu0
        %677 = vdwg.mxu0
        %678 = vmatprep.subr.mxu0 0.0
        %679 = vmatpush1.msra.mxu0 0.0
        %680 = vmatprep.subr.mxu0 0.0
        %681 = vmatpush1.msra.mxu0 0.0
        %682 = vmatprep.subr.mxu0 0.0
        %683 = vmatpush1.msra.mxu0 0.0
        %684 = vmatprep.subr.mxu0 0.0
        %685 = vmatpush1.msra.mxu0 0.0
        %686 = vmatprep.subr.mxu0 0.0
        %687 = vmatpush1.msra.mxu0 0.0
        %688 = vmatprep.subr.mxu0 0.0
        %689 = vmatpush1.msra.mxu0 0.0
        %690 = vmatprep.subr.mxu0 0.0
        %691 = vmatpush1.msra.mxu0 0.0
        %692 = vmatprep.subr.mxu0 0.0
        %693 = vmatpush1.msra.mxu0 0.0
        %694 = vmatprep.subr.mxu0 0.0
        %v695 = vand.u32 %v215, 4294901760
        %696 = vmatpush1.msra.mxu0 %v695
        %697 = vmatprep.subr.mxu0 0.0
        %v698 = vand.u32 %v214, 4294901760
        %699 = vmatpush1.msra.mxu0 %v698
        %700 = vmatprep.subr.mxu0 0.0
        %v701 = vand.u32 %v213, 4294901760
        %702 = vmatpush1.msra.mxu0 %v701
        %703 = vmatprep.subr.mxu0 0.0
        %v704 = vand.u32 %v212, 4294901760
        %705 = vmatpush1.msra.mxu0 %v704
        %706 = vmatprep.subr.mxu0 0.0
        %v707 = vand.u32 %v211, 4294901760
        %708 = vmatpush1.msra.mxu0 %v707
        %709 = vmatprep.subr.mxu0 0.0
        %v710 = vand.u32 %v210, 4294901760
        %711 = vmatpush1.msra.mxu0 %v710
        %712 = vmatprep.subr.mxu0 0.0
        %v713 = vand.u32 %v209, 4294901760
        %714 = vmatpush1.msra.mxu0 %v713
        %715 = vmatprep.subr.mxu0 0.0
        %v716 = vand.u32 %v208, 4294901760
        %717 = vmatpush1.msra.mxu0 %v716
        %718 = vmatprep.subr.mxu0 0.0
        %719 = vmatpush2.msra.mxu0 0.0
        %720 = vmatprep.subr.mxu0 0.0
        %721 = vmatpush2.msra.mxu0 0.0
        %722 = vmatprep.subr.mxu0 0.0
        %723 = vmatpush2.msra.mxu0 0.0
        %724 = vmatprep.subr.mxu0 0.0
        %725 = vmatpush2.msra.mxu0 0.0
        %726 = vmatprep.subr.mxu0 0.0
        %727 = vmatpush2.msra.mxu0 0.0
        %728 = vmatprep.subr.mxu0 0.0
        %729 = vmatpush2.msra.mxu0 0.0
        %730 = vmatprep.subr.mxu0 0.0
        %731 = vmatpush2.msra.mxu0 0.0
        %732 = vmatprep.subr.mxu0 0.0
        %733 = vmatpush2.msra.mxu0 0.0
        %734 = vmatprep.subr.mxu0 0.0
        %735 = vmatpush2.msra.mxu0 0.0
        %736 = vmatprep.subr.mxu0 0.0
        %737 = vmatpush2.msra.mxu0 0.0
        %738 = vmatprep.subr.mxu0 0.0
        %739 = vmatpush2.msra.mxu0 0.0
        %740 = vmatprep.subr.mxu0 0.0
        %741 = vmatpush2.msra.mxu0 0.0
        %742 = vmatprep.subr.mxu0 0.0
        %743 = vmatpush2.msra.mxu0 0.0
        %744 = vmatprep.subr.mxu0 0.0
        %745 = vmatpush2.msra.mxu0 0.0
        %746 = vmatprep.subr.mxu0 0.0
        %747 = vmatpush2.msra.mxu0 0.0
        %748 = vmatprep.subr.mxu0 0.0
        %749 = vmatpush2.msra.mxu0 0.0
        %750 = vmatprep.mubr.f32.mxu0 0.0
        %v751 = vand.u32 %v218, 4294901760
        %752 = vmatmul.mubr.f32.gmra.mxu0 %v751
        %v753 = vpop.f32.mrf.mxu0
        %v754 = vadd.f32 %v675, %v753
        %v755 = vpop.f32.mrf.mxu0
        %756 = vdwg.mxu0
        %757 = vmax.xlane.f32.xlu0 %v198
        %v758 = vpop.xlane.xlu0 %757
        %v759 = vsub.f32 %v198, %v758
        %v760 = vmul.f32 %v759, 1.442695
        %v761 = vpow.pop %v760
        %762 = vadd.xlane.f32.xlu0 %v761
        %v763 = vpop.xlane.xlu0 %762
        %v764 = vlog2.pop %v763
        %v765 = vmul.f32 %v764, 0.6931472
        %v766 = vmul.f32 %v754, %v198
        %767 = vadd.xlane.f32.xlu0 %v766
        %v768 = vpop.xlane.xlu0 %767
        %769 = vadd.xlane.f32.xlu0 %v754
        %v770 = vpop.xlane.xlu0 %769
        %v771 = vadd.f32 %v758, %v765
        %v772 = vmul.f32 %v770, %v771
        %v773 = vsub.f32 %v772, %v768
        %vm774 = vcmask 7168
        %775 = vst.msk [vmem:[%s197] sm:$0xff] %vm774, %v773
        %p776 = scmp.lt.s32.totalorder %s15, 1
        %s777 = scalar_select %p776, %s15, 1
        %s778 = smul.addr %s777, 8
        %s779 = scalar_lea.vmem %s3, %s778
        // Predicated region
        $region37: #{partial_loss_forward.1} parent=31 // pred_check
          %p780 = pneg %p106
        $region38: #{partial_loss_forward.1} parent=31 // pred_check_branch
          %782 = sbr.rel (%p780) target = $region40
        $region39: #{partial_loss_forward.1} parent=31 // pred_region
          _
        $region40: #{partial_loss_forward.1} parent=31 // pred_fallthru
          _
      $region32: #{partial_loss_forward.1} parent=5 // pred_fallthru
        _
      %p783 = scmp.le.s32.totalorder 2, %s10
      // Predicated region
      $region41: #{partial_loss_forward.1} parent=5 // pred_check
        %p784 = pneg %p783
      $region42: #{partial_loss_forward.1} parent=5 // pred_check_branch
        %786 = sbr.rel (%p784) target = $region44
      $region43: #{partial_loss_forward.1} parent=5 // pred_region
        %s787 = ssub.s32 %s10, 2
        // Predicated region
        $region45: #{partial_loss_forward.1} parent=43 // pred_check
          %p788 = pneg %p112
        $region46: #{partial_loss_forward.1} parent=43 // pred_check_branch
          %790 = sbr.rel (%p788) target = $region48
        $region47: #{partial_loss_forward.1} parent=43 // pred_region
          %p791 = scmp.lt.s32.totalorder %s16, 1
          %s792 = scalar_select %p791, %s16, 1
          %s793 = smul.addr %s792, 8
          %s794 = scalar_lea.vmem %s3, %s793
        $region48: #{partial_loss_forward.1} parent=43 // pred_fallthru
          _
      $region44: #{partial_loss_forward.1} parent=5 // pred_fallthru
        _
    $region6: #{partial_loss_forward.1} parent=1 // loop_footer
      %s14 = sadd.s32 1, %s10
    $region7: #{partial_loss_forward.1} parent=1 // loop_footer_branch
      %9 = sbr.rel target = $region3
    $region8: #{partial_loss_forward.1} parent=1 // loop_exit
      _
    %795 = vsyncpa [#allocation3], 1
    %s796 = scalar_lea.sflag [#allocation3], 1
    %797 = vsyncpa %s796, 1

</llo_original>
